<compile_context>
chip_gen: v5e
topology: v5e:2x2
jax: 0.10.0
libtpu: 0.0.40
codegen_flags: <defaults>
</compile_context>

<pallas_src>
import functools

import jax
import jax.numpy as jnp
from jax.experimental import pallas as pl
from jax.experimental.pallas import tpu as pltpu

_MiB = 1024 * 1024


def _round_up(x: int, m: int) -> int:
    return (x + m - 1) // m * m


def _pad2d(a, rows: int, cols: int):
    r, c = a.shape
    if r == rows and c == cols:
        return a
    return jnp.pad(a, ((0, rows - r), (0, cols - c)))


def _physical_vmem_bytes() -> int:
    try:
        return int(pltpu.get_tpu_info().vmem_capacity_bytes)
    except Exception:  # pragma: no cover - fall back conservatively (v7x size)
        return 64 * _MiB


def _vmem_cap_bytes() -> int:
    # Leave headroom for Mosaic internal scratch: ~48 MiB on v7x (64 MiB/TC
    # physical), up to ~100 MiB on v5e/v6e (128 MiB/TC physical).
    phys = _physical_vmem_bytes()
    return 48 * _MiB if phys <= 64 * _MiB else 100 * _MiB


# ----------------------------------------------------------------------------
# Kernels
# ----------------------------------------------------------------------------
def _ws_kernel(x_ref, w_ref, b_ref, o_ref):
    """Weight-stationary: whole K and N in one shot, ReLU fused, one store."""
    acc = jnp.dot(x_ref[...], w_ref[...], preferred_element_type=jnp.float32)
    acc = acc + b_ref[...].astype(jnp.float32)
    o_ref[...] = jnp.maximum(acc, 0.0).astype(o_ref.dtype)


def _mm3d_kernel(x_ref, w_ref, b_ref, o_ref, acc_ref):
    """3D-tiled fallback: f32 accumulator, bias folded at k==0, ReLU at last k."""
    k = pl.program_id(2)

    @pl.when(k == 0)
    def _():
        acc_ref[...] = jnp.broadcast_to(
            b_ref[...].astype(jnp.float32), acc_ref.shape
        )

    acc_ref[...] += jnp.dot(
        x_ref[...], w_ref[...], preferred_element_type=jnp.float32
    )

    @pl.when(k == pl.num_programs(2) - 1)
    def _():
        o_ref[...] = jnp.maximum(acc_ref[...], 0.0).astype(o_ref.dtype)


# ----------------------------------------------------------------------------
# Wrapper
# ----------------------------------------------------------------------------
def _pick_ws_tile_m(B, Kp, Np, x_item, w_item, out_item, cap):
    """Largest batch tile (multiple of 8) whose double-buffered footprint fits."""
    Bp = _round_up(B, 8)
    for t in (512, 256, 128, 64, 32, 16, 8):
        tm = min(t, Bp)
        fp = 2 * (tm * Kp * x_item + Kp * Np * w_item + Np * 4
                  + tm * Np * out_item)
        if fp <= cap:
            return tm, fp
    return None, None


@functools.partial(jax.jit, static_argnames=("o_f", "force_grid_3d"))
def mlp_bottom_forward(x, w_p, b_p, o_f=None, force_grid_3d=False):
    """relu(x @ W^T + b) with W pre-transposed/padded by prepare_params().

    x   : (B, i_f)
    w_p : (Kp, Np)  padded, transposed weight (from prepare_params)
    b_p : (1, Np)   padded bias (from prepare_params)
    o_f : true output feature count (for un-padding); defaults to Np.
    """
    B, i_f = x.shape
    Kp, Np = w_p.shape
    assert Kp >= i_f and Kp % 128 == 0 and Np % 128 == 0, \
        "weights/bias must come from prepare_params()"
    if o_f is None:
        o_f = Np

    out_dtype = x.dtype
    # bf16 MXU path: if the prepared weight is narrower than x, cast x as well
    # (halves x HBM traffic, f32 accumulation keeps the result stable).
    if jnp.dtype(w_p.dtype).itemsize < jnp.dtype(x.dtype).itemsize:
        x = x.astype(w_p.dtype)

    x_item = jnp.dtype(x.dtype).itemsize
    w_item = jnp.dtype(w_p.dtype).itemsize
    out_item = jnp.dtype(out_dtype).itemsize
    cap = _vmem_cap_bytes()

    tm_ws, fp_ws = (None, None)
    if not force_grid_3d:
        tm_ws, fp_ws = _pick_ws_tile_m(B, Kp, Np, x_item, w_item, out_item, cap)

    if tm_ws is not None:
        # ------------------ weight-stationary 1D grid ------------------
        Mp = _round_up(B, tm_ws)
        x_p = _pad2d(x, Mp, Kp)
        vmem_limit = min(max(int(fp_ws * 1.25), 16 * _MiB), cap)
        cost = pl.CostEstimate(
            flops=2 * Mp * Kp * Np,
            transcendentals=0,
            bytes_accessed=(Mp * Kp * x_item + Kp * Np * w_item
                            + Np * 4 + Mp * Np * out_item))

        grid_spec = pltpu.PrefetchScalarGridSpec(
            num_scalar_prefetch=0,
            grid=(Mp // tm_ws,),
            in_specs=[
                pl.BlockSpec((tm_ws, Kp), lambda i: (i, 0)),  # x: streamed once
                pl.BlockSpec((Kp, Np), lambda i: (0, 0)),     # W: resident
                pl.BlockSpec((1, Np), lambda i: (0, 0)),      # bias: resident
            ],
            out_specs=pl.BlockSpec((tm_ws, Np), lambda i: (i, 0)),
        )
        y_p = pl.pallas_call(
            _ws_kernel,
            out_shape=jax.ShapeDtypeStruct((Mp, Np), out_dtype),
            grid_spec=grid_spec,
            compiler_params=pltpu.CompilerParams(
                dimension_semantics=("parallel",),
                vmem_limit_bytes=vmem_limit),
            cost_estimate=cost,
        )(x_p, w_p, b_p)
    else:
        # ------------------ 3D tiled fallback (huge weights) ------------------
        tm = min(256, _round_up(B, 8))
        tn = min(256, Np)
        tk = min(256, Kp)
        Mp = _round_up(B, tm)
        x_p = _pad2d(x, Mp, Kp)
        fp = (2 * (tm * tk * x_item + tk * tn * w_item + tn * 4)
              + 2 * tm * tn * out_item + tm * tn * 4)
        vmem_limit = min(max(int(fp * 1.25), 16 * _MiB), cap)
        cost = pl.CostEstimate(
            flops=2 * Mp * Kp * Np,
            transcendentals=0,
            bytes_accessed=(Mp * Kp * x_item + Kp * Np * w_item
                            + Np * 4 + Mp * Np * out_item))

        grid_spec = pltpu.PrefetchScalarGridSpec(
            num_scalar_prefetch=0,
            grid=(Mp // tm, Np // tn, Kp // tk),
            in_specs=[
                pl.BlockSpec((tm, tk), lambda i, j, k: (i, k)),
                pl.BlockSpec((tk, tn), lambda i, j, k: (k, j)),
                pl.BlockSpec((1, tn), lambda i, j, k: (0, j)),
            ],
            out_specs=pl.BlockSpec((tm, tn), lambda i, j, k: (i, j)),
            scratch_shapes=[pltpu.VMEM((tm, tn), jnp.float32)],
        )
        y_p = pl.pallas_call(
            _mm3d_kernel,
            out_shape=jax.ShapeDtypeStruct((Mp, Np), out_dtype),
            grid_spec=grid_spec,
            compiler_params=pltpu.CompilerParams(
                dimension_semantics=("parallel", "parallel", "arbitrary"),
                vmem_limit_bytes=vmem_limit),
            cost_estimate=cost,
        )(x_p, w_p, b_p)

    if Mp != B or Np != o_f:
        y_p = y_p[:B, :o_f]
    return y_p


# ----------------------------------------------------------------------------
# Parameter helpers (match nn.Linear(i_f, o_f) + xavier_normal_ weight init)
# ----------------------------------------------------------------------------
def init_params(key, i_f, o_f, dtype=jnp.float32):
    kw, kb = jax.random.split(key)
    std = jnp.sqrt(2.0 / (i_f + o_f))                    # xavier normal
    w = jax.random.normal(kw, (o_f, i_f), dtype) * std   # torch layout (o_f, i_f)
    bound = 1.0 / jnp.sqrt(jnp.asarray(i_f, dtype))      # default torch bias init
    b = jax.random.uniform(kb, (o_f,), dtype, -bound, bound)
    return w, b


def prepare_params(w, b, *, dtype=None, block_k=128, block_n=128):
    """One-time prep (hoisted out of the hot path): transpose W to (i_f, o_f),
    optionally cast it to a narrower MXU dtype (e.g. jnp.bfloat16), and
    zero-pad W/bias to 128-aligned tiles."""
    w = jnp.asarray(w)
    b = jnp.asarray(b)
    o_f, i_f = w.shape
    w_t = w.T
    if dtype is not None:
        w_t = w_t.astype(dtype)
    Kp = _round_up(i_f, block_k)
    Np = _round_up(o_f, block_n)
    w_p = _pad2d(w_t, Kp, Np)
    b_p = jnp.pad(b.astype(jnp.float32), (0, Np - o_f)).reshape(1, Np)
    return w_p, b_p, o_f


if __name__ == "__main__":
    key = jax.random.PRNGKey(0)
    B, i_f, o_f = 16, 64, 32   # small demo shapes; kernel pads K/N to 128

    kx, kp = jax.random.split(key)
    x = jax.random.normal(kx, (B, i_f), jnp.float32)
    w, b = init_params(kp, i_f, o_f)

    y_ref = jnp.maximum(x @ w.T + b, 0.0)   # pure-JAX reference

    # Default f32 params -> weight-stationary 1D-grid path.
    w_p, b_p, true_of = prepare_params(w, b)
    y = mlp_bottom_forward(x, w_p, b_p, o_f=true_of)
    jax.block_until_ready(y)
    assert y.shape == (B, o_f)
    assert jnp.allclose(y, y_ref, atol=1e-5, rtol=1e-5)

    # Force the 3D-tiled fallback path (used when the weight is VMEM-too-big).
    y3 = mlp_bottom_forward(x, w_p, b_p, o_f=true_of, force_grid_3d=True)
    jax.block_until_ready(y3)
    assert jnp.allclose(y3, y_ref, atol=1e-5, rtol=1e-5)

    # Optional bf16 MXU operands with f32 accumulation (faster, slightly lossy).
    w_p16, b_p16, _ = prepare_params(w, b, dtype=jnp.bfloat16)
    y16 = mlp_bottom_forward(x, w_p16, b_p16, o_f=true_of)
    jax.block_until_ready(y16)
    assert y16.dtype == x.dtype
    assert jnp.allclose(y16, y_ref, atol=5e-2, rtol=5e-2)

    print("KERNEL_OK")
</pallas_src>

<mosaic_0001>
module attributes {stable_mosaic.version = 11 : i64} {
  func.func @_ws_kernel(%arg0: i32, %arg1: memref<16x128xf32, #tpu.memory_space<vmem>>, %arg2: memref<128x128xf32, #tpu.memory_space<vmem>>, %arg3: memref<1x128xf32, #tpu.memory_space<vmem>>, %arg4: memref<16x128xf32, #tpu.memory_space<vmem>>) attributes {dimension_semantics = [#tpu.dimension_semantics<parallel>], iteration_bounds = array<i64: 1>, scalar_prefetch = 0 : i64, scratch_operands = 0 : i64, tpu.core_type = #tpu.core_type<tc>, window_params = [{transform_indices = @transform_0, window_bounds = array<i64: 16, 128>}, {pipeline_mode = #tpu.pipeline_mode<synchronous>, transform_indices = @transform_1, window_bounds = array<i64: 128, 128>}, {pipeline_mode = #tpu.pipeline_mode<synchronous>, transform_indices = @transform_2, window_bounds = array<i64: 1, 128>}, {transform_indices = @transform_3, window_bounds = array<i64: 16, 128>}]} {
    %c0 = arith.constant 0 : index
    %c0_0 = arith.constant 0 : index
    %0 = vector.load %arg1[%c0, %c0_0] : memref<16x128xf32, #tpu.memory_space<vmem>>, vector<16x128xf32>
    %c0_1 = arith.constant 0 : index
    %c0_2 = arith.constant 0 : index
    %1 = vector.load %arg2[%c0_1, %c0_2] : memref<128x128xf32, #tpu.memory_space<vmem>>, vector<128x128xf32>
    %cst = arith.constant dense<0.000000e+00> : vector<16x128xf32>
    %2 = tpu.matmul %0, %1, %cst {dimension_numbers = #tpu.dot_dimension_numbers<[1], [0], [0], [1], [0, 0, 1, 1], [], []>} : vector<16x128xf32>, vector<128x128xf32>, vector<16x128xf32> -> vector<16x128xf32>
    %c0_3 = arith.constant 0 : index
    %c0_4 = arith.constant 0 : index
    %3 = vector.load %arg3[%c0_3, %c0_4] : memref<1x128xf32, #tpu.memory_space<vmem>>, vector<1x128xf32>
    %4 = vector.broadcast %3 : vector<1x128xf32> to vector<16x128xf32>
    %5 = arith.addf %2, %4 : vector<16x128xf32>
    %cst_5 = arith.constant 0.000000e+00 : f32
    %6 = vector.broadcast %cst_5 : f32 to vector<16x128xf32>
    %7 = arith.maximumf %5, %6 : vector<16x128xf32>
    %c0_6 = arith.constant 0 : index
    %c0_7 = arith.constant 0 : index
    %8 = vector.load %arg4[%c0_6, %c0_7] : memref<16x128xf32, #tpu.memory_space<vmem>>, vector<16x128xf32>
    tpu.vector_store %arg4[%c0_6, %c0_7], %7 {strides = array<i32>} : memref<16x128xf32, #tpu.memory_space<vmem>>, vector<16x128xf32>,
    return
  }
  func.func @transform_0(%arg0: i32) -> (i32, i32) {
    %c0_i32 = arith.constant 0 : i32
    %c0_i32_0 = arith.constant 0 : i32
    return %arg0, %c0_i32 : i32, i32
  }
  func.func @transform_1(%arg0: i32) -> (i32, i32) {
    %c0_i32 = arith.constant 0 : i32
    %c0_i32_0 = arith.constant 0 : i32
    %c0_i32_1 = arith.constant 0 : i32
    return %c0_i32, %c0_i32_0 : i32, i32
  }
  func.func @transform_2(%arg0: i32) -> (i32, i32) {
    %c0_i32 = arith.constant 0 : i32
    %c0_i32_0 = arith.constant 0 : i32
    %c0_i32_1 = arith.constant 0 : i32
    return %c0_i32, %c0_i32_0 : i32, i32
  }
  func.func @transform_3(%arg0: i32) -> (i32, i32) {
    %c0_i32 = arith.constant 0 : i32
    %c0_i32_0 = arith.constant 0 : i32
    return %arg0, %c0_i32 : i32, i32
  }
}

</mosaic_0001>

<llo_original>
// kernel: mlp_bottom_forward.1
$region0: #{mlp_bottom_forward.1}
  #allocation0 [shape = 'u32[]', space=smem, size = 0x4, offset = 0x4, fixed_abs, tag = 'smem constant byte address 0x4 - core index']
  #allocation1 [shape = 'u32[72,128]{1,0:T(1,128)}', space=vmem, size = 0x9000, scoped, tag = 'internal scratch']
  %s0 = inlined_call_operand.vmem [shape: f32[16,128], index: 0, kind: input, shape index: {}]
  %s1 = inlined_call_operand.hbm [shape: f32[128,128], index: 1, kind: input, shape index: {}]
  %s2 = inlined_call_operand.vmem [shape: f32[1,128], index: 2, kind: input, shape index: {}]
  %s3 = inlined_call_operand.hbm [shape: f32[16,128], index: 3, kind: output, shape index: {}]
  %s4 = sld [smem:[#allocation0]]
  $region26: #{mlp_bottom_forward.1} parent=0
    _
  %s6 = ssub.s32 1, %s4
  %s7 = scalar_select 0, %s6, %s4
  $region1: #{mlp_bottom_forward.1} parent=0
    #allocation2 [shape = 'u8[65536]{0}', space=vmem, size = 0x10000, scoped, tag = 'input window, operand 1, single buffered']
    #allocation3 [shape = 's32[1]{0}', space=sflag, size = 0x4, scoped, tag = 'scoped memory for mlp_bottom_forward.1']
    #allocation4 [shape = 's32[1]{0}', space=sflag, size = 0x4, scoped, tag = 'scoped memory for mlp_bottom_forward.1']
    #allocation5 [shape = 'u8[8192]{0}', space=vmem, size = 0x2000, scoped, tag = 'output window, operand 0, single buffered']
    %8 = vsyncpa [#allocation3], 0
    %9 = vsyncpa [#allocation4], 0
    // Predicated region
    $region2: #{mlp_bottom_forward.1} parent=1 // pred_check
      _
    $region3: #{mlp_bottom_forward.1} parent=1 // pred_check_branch
      %11 = sbr.rel (0) target = $region5
    $region4: #{mlp_bottom_forward.1} parent=1 // pred_region
      _
    $region5: #{mlp_bottom_forward.1} parent=1 // pred_fallthru
      _
    // Predicated region
    $region6: #{mlp_bottom_forward.1} parent=1 // pred_check
      _
    $region7: #{mlp_bottom_forward.1} parent=1 // pred_check_branch
      %13 = sbr.rel (0) target = $region9
    $region8: #{mlp_bottom_forward.1} parent=1 // pred_region
      %15 = vsyncadd [#allocation3], 0
      %s16 = sshll.u32 %s1, 4
      %s17 = int_to_ptr.hbm [resolvable:$true] %s16
      %s18 = sshll.u32 [#allocation2], 4
      %s19 = int_to_ptr.vmem [resolvable:$true] %s18
      %24 = dma.hbm_to_vmem [thread:$0]  %s17, 2048, %s19, [#allocation3], 128, 128, 8
    $region9: #{mlp_bottom_forward.1} parent=1 // pred_fallthru
      _
    // Predicated region
    $region10: #{mlp_bottom_forward.1} parent=1 // pred_check
      _
    $region11: #{mlp_bottom_forward.1} parent=1 // pred_check_branch
      %26 = sbr.rel (0) target = $region13
    $region12: #{mlp_bottom_forward.1} parent=1 // pred_region
      _
    $region13: #{mlp_bottom_forward.1} parent=1 // pred_fallthru
      _
    // Predicated region
    $region14: #{mlp_bottom_forward.1} parent=1 // pred_check
      _
    $region15: #{mlp_bottom_forward.1} parent=1 // pred_check_branch
      %28 = sbr.rel (0) target = $region17
    $region16: #{mlp_bottom_forward.1} parent=1 // pred_region
      %30 = dma.done [#allocation3], 2048
    $region17: #{mlp_bottom_forward.1} parent=1 // pred_fallthru
      _
    %v31 = vld [vmem:[%s0] sm:$0xff]
    %v32 = vld [vmem:[%s0 + $0x8] sm:$0xff]
    %v33 = vld [vmem:[#allocation2] sm:$0xff]
    %v34 = vld [vmem:[#allocation2 + $0x8] sm:$0xff]
    %v35 = vld [vmem:[#allocation2 + $0x10] sm:$0xff]
    %v36 = vld [vmem:[#allocation2 + $0x18] sm:$0xff]
    %v37 = vld [vmem:[#allocation2 + $0x20] sm:$0xff]
    %v38 = vld [vmem:[#allocation2 + $0x28] sm:$0xff]
    %v39 = vld [vmem:[#allocation2 + $0x30] sm:$0xff]
    %v40 = vld [vmem:[#allocation2 + $0x38] sm:$0xff]
    %v41 = vld [vmem:[#allocation2 + $0x40] sm:$0xff]
    %v42 = vld [vmem:[#allocation2 + $0x48] sm:$0xff]
    %v43 = vld [vmem:[#allocation2 + $0x50] sm:$0xff]
    %v44 = vld [vmem:[#allocation2 + $0x58] sm:$0xff]
    %v45 = vld [vmem:[#allocation2 + $0x60] sm:$0xff]
    %v46 = vld [vmem:[#allocation2 + $0x68] sm:$0xff]
    %v47 = vld [vmem:[#allocation2 + $0x70] sm:$0xff]
    %v48 = vld [vmem:[#allocation2 + $0x78] sm:$0xff]
    %v49 = vld [vmem:[%s2] sm:$0x1]
    %v51 = vperm.slane %v49, 0
    %53 = vmatpush.msra.mxu0 %v48
    %54 = vmatpush.msra.mxu0 %v47
    %55 = vmatpush.msra.mxu0 %v46
    %56 = vmatpush.msra.mxu0 %v45
    %57 = vmatpush.msra.mxu0 %v44
    %58 = vmatpush.msra.mxu0 %v43
    %59 = vmatpush.msra.mxu0 %v42
    %60 = vmatpush.msra.mxu0 %v41
    %61 = vmatpush.msra.mxu0 %v40
    %62 = vmatpush.msra.mxu0 %v39
    %63 = vmatpush.msra.mxu0 %v38
    %64 = vmatpush.msra.mxu0 %v37
    %65 = vmatpush.msra.mxu0 %v36
    %66 = vmatpush.msra.mxu0 %v35
    %67 = vmatpush.msra.mxu0 %v34
    %68 = vmatpush.msra.mxu0 %v33
    %69 = vmatmul.f32.gmra.mxu0 %v31
    %v70 = vpop.f32.mrf.mxu0
    %v71 = vadd.f32 %v51, %v70
    %72 = vmatmul.f32.gmra.mxu0 %v32
    %v73 = vpop.f32.mrf.mxu0
    %v74 = vadd.f32 %v51, %v73
    %75 = vdwg.mxu0
    %v76 = vmax.f32 %v71, 0.0
    %v77 = vmax.f32 %v74, 0.0
    %78 = vst [vmem:[#allocation5] sm:$0xff] %v76
    %79 = vst [vmem:[#allocation5 + $0x8] sm:$0xff] %v77
    // Predicated region
    $region18: #{mlp_bottom_forward.1} parent=1 // pred_check
      _
    $region19: #{mlp_bottom_forward.1} parent=1 // pred_check_branch
      %81 = sbr.rel (0) target = $region21
    $region20: #{mlp_bottom_forward.1} parent=1 // pred_region
      %83 = vsyncadd [#allocation4], 0
      %s84 = sshll.u32 [#allocation5], 4
      %s85 = int_to_ptr.vmem [resolvable:$true] %s84
      %s86 = sshll.u32 %s3, 4
      %s87 = int_to_ptr.hbm [resolvable:$true] %s86
      %92 = dma.vmem_to_hbm [thread:$0]  %s85, 256, %s87, [#allocation4], 128, 128, 8
    $region21: #{mlp_bottom_forward.1} parent=1 // pred_fallthru
      _
    // Predicated region
    $region22: #{mlp_bottom_forward.1} parent=1 // pred_check
      _
    $region23: #{mlp_bottom_forward.1} parent=1 // pred_check_branch
      %94 = sbr.rel (0) target = $region25
    $region24: #{mlp_bottom_forward.1} parent=1 // pred_region
      %96 = dma.done [#allocation4], 256
    $region25: #{mlp_bottom_forward.1} parent=1 // pred_fallthru
      _
    %97 = vsyncpa [#allocation3], 1
    %98 = vsyncpa [#allocation4], 1

</llo_original>
